<compile_context>
chip_gen: v5e
topology: v5e:2x2
jax: 0.10.0
libtpu: 0.0.40
codegen_flags: <defaults>
</compile_context>

<pallas_src>
import functools

import jax
import jax.numpy as jnp
from jax.experimental import pallas as pl
from jax.experimental.pallas import tpu as pltpu

_LANES = 128
_SUBLANES = 8
# 8192 x 128 f32 = 4 MiB per streamed block; 2 inputs x 2 buffers = 16 MiB.
# Sweepable; vmem_limit_bytes below is derived from the actual footprint.
_TILE_ROWS_MAX = 8192
_NUM_SHARDS = 2  # leading "parallel" grid axis; uses both TCs on v7x.


def _seg_loss_kernel(offset_ref, positions_ref, mask_ref, out_mask_ref,
                     pred_part_ref, mask_part_ref, acc_ref, *,
                     rows_pred, tile_r, tiles_per_shard, num_data_tiles,
                     need_tile_mask):
    p = pl.program_id(0)   # shard (parallel axis)
    i = pl.program_id(1)   # tile within shard (reduction axis)

    @pl.when(i == 0)
    def _init():
        acc_ref[...] = jnp.zeros_like(acc_ref)

    a = offset_ref[...].astype(jnp.float32)
    b = positions_ref[...].astype(jnp.float32)

    def _fold(sq):
        # Fold the tile into the resident (8,128) accumulator with pure VPU
        # adds (tile-aligned reshape -> no cross-lane work in steady state).
        acc_ref[...] += sq.reshape(tile_r // _SUBLANES, _SUBLANES, _LANES).sum(axis=0)

    if not need_tile_mask:
        # All tiles are fully inside the data range: pure unmasked VPU path.
        d = a - b
        _fold(d * d)
    else:
        g = p * tiles_per_shard + i   # global tile index (may exceed data range)
        # Tiles strictly below `full_tiles` are guaranteed fully valid.
        full_tiles = num_data_tiles - 1 if (rows_pred % tile_r) else num_data_tiles

        @pl.when(g < full_tiles)
        def _steady():
            d = a - b
            _fold(d * d)

        @pl.when(g >= full_tiles)
        def _tail():
            # Partial last data tile and/or empty shard-padding tiles: zero
            # out rows past rows_pred.  (Lane padding up to n%128 is zero in
            # BOTH inputs, so it contributes 0 without extra masking.)
            row_ids = g * tile_r + jax.lax.broadcasted_iota(
                jnp.int32, (tile_r, _LANES), 0)
            d = jnp.where(row_ids < rows_pred, a - b, 0.0)
            _fold(d * d)

    is_last = i == tiles_per_shard - 1

    @pl.when(is_last)
    def _finalize_pred():
        pred_part_ref[0, 0] = jnp.sum(acc_ref[...])

    @pl.when(is_last & (p == 0))
    def _finalize_mask():
        # SmoothL1(out_mask, mask), beta=1.0, computed once on the resident
        # blocks by shard 0.  Identical zero padding -> diff==0 -> contributes
        # 0; divisor (true n_mask) is applied in the wrapper.
        dm = out_mask_ref[...].astype(jnp.float32) - mask_ref[...].astype(jnp.float32)
        ad = jnp.abs(dm)
        sl1 = jnp.where(ad < 1.0, 0.5 * dm * dm, ad - 0.5)
        mask_part_ref[0, 0] = jnp.sum(sl1)

    @pl.when(is_last & (p != 0))
    def _finalize_mask_zero():
        mask_part_ref[0, 0] = 0.0


def _flatten_lane_dense(x):
    """Flatten to (rows, 128) in the NATIVE dtype.

    Only lane alignment (n % 128) may require a materialized pad (the 2-D
    reshape needs it); row-tail raggedness is handled in-kernel, so no padded
    copy is made for already lane-aligned inputs.
    """
    flat = x.reshape(-1)
    n = flat.shape[0]
    pad = (-n) % _LANES
    if pad:  # static; skipped for lane-aligned sizes (no extra HBM pass)
        flat = jnp.pad(flat, (0, pad))
    return flat.reshape(-1, _LANES), n


def _round_up(x, m):
    return ((x + m - 1) // m) * m


def segmentation_loss(offset, positions, mask, out_mask, *,
                      tile_rows_max=_TILE_ROWS_MAX):
    """Pallas implementation of SegmentationLoss.forward.

    Returns (mask_loss, {'pred_loss': ..., 'mask_loss': ...}) as jnp scalars
    (device-side; no forced host sync, so the function is jittable).
    """
    off2d, n_pred = _flatten_lane_dense(offset)
    pos2d, _ = _flatten_lane_dense(positions)
    msk2d, n_mask = _flatten_lane_dense(mask)
    out2d, _ = _flatten_lane_dense(out_mask)

    rows_pred = off2d.shape[0]
    rows_mask = msk2d.shape[0]

    # Dtype-aware sublane multiple for the streamed blocks: 8 rows for 4-byte,
    # 16 for 2-byte (bf16 packs 2/sublane), 32 for 1-byte dtypes.
    itemsize = min(off2d.dtype.itemsize, pos2d.dtype.itemsize)
    sub = _SUBLANES * max(1, 4 // max(1, itemsize))

    tile_r = min(_round_up(tile_rows_max, sub), _round_up(rows_pred, sub))
    num_data_tiles = -(-rows_pred // tile_r)
    num_shards = _NUM_SHARDS if num_data_tiles >= _NUM_SHARDS else 1
    tiles_per_shard = -(-num_data_tiles // num_shards)
    need_tile_mask = (rows_pred % tile_r != 0) or \
                     (num_shards * tiles_per_shard != num_data_tiles)

    # Explicit VMEM budget: streamed double-buffers + resident mask blocks
    # (+ headroom).  Matters on v5e (16 MiB scoped default) and v7x (64 MiB
    # physical).  f32 itemsize used as a safe upper bound.
    vmem_limit = int(2 * 2 * tile_r * _LANES * 4          # offset/positions
                     + 2 * 2 * rows_mask * _LANES * 4     # mask/out_mask
                     + (4 << 20))                         # scratch + headroom
    vmem_limit = max(min(vmem_limit, 128 << 20), 16 << 20)

    nt = num_data_tiles
    tps = tiles_per_shard

    def _stream_map(p, i):
        # Clamp so shard-padding tiles never address past the array; their
        # contribution is masked to zero in-kernel.
        return (jnp.minimum(p * tps + i, nt - 1), 0)

    stream_spec = pl.BlockSpec((tile_r, _LANES), _stream_map)
    resident_spec = pl.BlockSpec((rows_mask, _LANES), lambda p, i: (0, 0))
    part_spec = pl.BlockSpec((1, 1), lambda p, i: (p, 0),
                             memory_space=pltpu.MemorySpace.SMEM)

    grid_spec = pltpu.PrefetchScalarGridSpec(
        num_scalar_prefetch=0,
        grid=(num_shards, tiles_per_shard),
        in_specs=[
            stream_spec,    # offset     (streamed)
            stream_spec,    # positions  (streamed)
            resident_spec,  # mask       (resident, DMA'd once per core)
            resident_spec,  # out_mask   (resident, DMA'd once per core)
        ],
        out_specs=(part_spec, part_spec),
        scratch_shapes=[pltpu.VMEM((_SUBLANES, _LANES), jnp.float32)],
    )

    kernel = functools.partial(
        _seg_loss_kernel,
        rows_pred=rows_pred, tile_r=tile_r, tiles_per_shard=tiles_per_shard,
        num_data_tiles=num_data_tiles, need_tile_mask=need_tile_mask)

    pred_parts, mask_parts = pl.pallas_call(
        kernel,
        out_shape=(
            jax.ShapeDtypeStruct((num_shards, 1), jnp.float32),
            jax.ShapeDtypeStruct((num_shards, 1), jnp.float32),
        ),
        grid_spec=grid_spec,
        compiler_params=pltpu.CompilerParams(
            dimension_semantics=("parallel", "arbitrary"),
            vmem_limit_bytes=vmem_limit),
    )(off2d, pos2d, msk2d, out2d)

    pred_loss = jnp.sum(pred_parts) / jnp.float32(n_pred)
    mask_loss = jnp.sum(mask_parts) / jnp.float32(n_mask)
    # Mirror the PyTorch return structure; the .cpu().item() host sync of the
    # original module is intentionally left to the caller.
    return mask_loss, {"pred_loss": pred_loss, "mask_loss": mask_loss}


def _reference(offset, positions, mask, out_mask):
    """Plain-JAX reference for correctness checking."""
    pred_loss = jnp.mean((offset - positions) ** 2)
    d = out_mask - mask
    ad = jnp.abs(d)
    mask_loss = jnp.mean(jnp.where(ad < 1.0, 0.5 * d * d, ad - 0.5))
    return pred_loss, mask_loss


def _check_close(actual, expected, name):
    a, e = float(actual), float(expected)
    assert abs(a - e) <= 1e-5 + 1e-4 * abs(e), (name, a, e)


if __name__ == "__main__":
    key = jax.random.PRNGKey(0)
    k1, k2, k3, k4 = jax.random.split(key, 4)

    # Shapes consistent with a segmentation head:
    #   offset / positions : (N, C, H, W) = (2, 4, 16, 16)
    #   mask / out_mask    : (N, 1, H, W) = (2, 1, 16, 16)
    offset = jax.random.normal(k1, (2, 4, 16, 16), dtype=jnp.float32)
    positions = jax.random.normal(k2, (2, 4, 16, 16), dtype=jnp.float32)
    mask = jax.random.normal(k3, (2, 1, 16, 16), dtype=jnp.float32)
    out_mask = jax.random.normal(k4, (2, 1, 16, 16), dtype=jnp.float32)

    loss_fn = jax.jit(segmentation_loss)
    mask_loss, loss_dict = loss_fn(offset, positions, mask, out_mask)
    jax.block_until_ready((mask_loss, loss_dict))

    ref_pred, ref_mask = _reference(offset, positions, mask, out_mask)
    _check_close(loss_dict["pred_loss"], ref_pred, "pred_loss")
    _check_close(loss_dict["mask_loss"], ref_mask, "mask_loss")
    _check_close(mask_loss, ref_mask, "mask_loss_ret")

    # Second check: lane-misaligned shapes with a tiny forced tile size so the
    # ragged-tail, multi-tile, shard-padding and dual-shard-combine paths are
    # all exercised (still small data).
    k5, k6, k7, k8 = jax.random.split(jax.random.PRNGKey(1), 4)
    offset2 = jax.random.normal(k5, (2, 4, 33, 33), dtype=jnp.float32)
    positions2 = jax.random.normal(k6, (2, 4, 33, 33), dtype=jnp.float32)
    mask2 = jax.random.normal(k7, (2, 1, 33, 33), dtype=jnp.float32)
    out_mask2 = jax.random.normal(k8, (2, 1, 33, 33), dtype=jnp.float32)

    loss_fn2 = jax.jit(functools.partial(segmentation_loss, tile_rows_max=16))
    mask_loss2, loss_dict2 = loss_fn2(offset2, positions2, mask2, out_mask2)
    jax.block_until_ready((mask_loss2, loss_dict2))

    ref_pred2, ref_mask2 = _reference(offset2, positions2, mask2, out_mask2)
    _check_close(loss_dict2["pred_loss"], ref_pred2, "pred_loss2")
    _check_close(loss_dict2["mask_loss"], ref_mask2, "mask_loss2")
    _check_close(mask_loss2, ref_mask2, "mask_loss2_ret")

    print("KERNEL_OK")
</pallas_src>

<mosaic_0001>
module attributes {stable_mosaic.version = 11 : i64} {
  func.func @_seg_loss_kernel(%arg0: i32, %arg1: i32, %arg2: memref<16x128xf32, #tpu.memory_space<vmem>>, %arg3: memref<16x128xf32, #tpu.memory_space<vmem>>, %arg4: memref<4x128xf32, #tpu.memory_space<vmem>>, %arg5: memref<4x128xf32, #tpu.memory_space<vmem>>, %arg6: memref<1x1xf32, #tpu.memory_space<smem>>, %arg7: memref<1x1xf32, #tpu.memory_space<smem>>, %arg8: memref<8x128xf32, #tpu.memory_space<vmem>>) attributes {dimension_semantics = [#tpu.dimension_semantics<parallel>, #tpu.dimension_semantics<arbitrary>], iteration_bounds = array<i64: 1, 1>, scalar_prefetch = 0 : i64, scratch_operands = 1 : i64, tpu.core_type = #tpu.core_type<tc>, window_params = [{transform_indices = @transform_0, window_bounds = array<i64: 16, 128>}, {transform_indices = @transform_1, window_bounds = array<i64: 16, 128>}, {pipeline_mode = #tpu.pipeline_mode<synchronous>, transform_indices = @transform_2, window_bounds = array<i64: 4, 128>}, {pipeline_mode = #tpu.pipeline_mode<synchronous>, transform_indices = @transform_3, window_bounds = array<i64: 4, 128>}, {transform_indices = @transform_4, window_bounds = array<i64: 1, 1>}, {transform_indices = @transform_5, window_bounds = array<i64: 1, 1>}]} {
    %c0_i32 = arith.constant 0 : i32
    %0 = arith.cmpi eq, %arg1, %c0_i32 : i32
    %1 = arith.extui %0 : i1 to i32
    %c0_i32_0 = arith.constant 0 : i32
    %2 = arith.cmpi ne, %1, %c0_i32_0 : i32
    scf.if %2 {
      %cst_14 = arith.constant 0.000000e+00 : f32
      %23 = vector.broadcast %cst_14 : f32 to vector<8x128xf32>
      %c0_15 = arith.constant 0 : index
      %c0_16 = arith.constant 0 : index
      %24 = vector.load %arg8[%c0_15, %c0_16] : memref<8x128xf32, #tpu.memory_space<vmem>>, vector<8x128xf32>
      tpu.vector_store %arg8[%c0_15, %c0_16], %23 {strides = array<i32>} : memref<8x128xf32, #tpu.memory_space<vmem>>, vector<8x128xf32>,
    } else {
    }
    %c0 = arith.constant 0 : index
    %c0_1 = arith.constant 0 : index
    %3 = vector.load %arg2[%c0, %c0_1] : memref<16x128xf32, #tpu.memory_space<vmem>>, vector<16x128xf32>
    %c0_2 = arith.constant 0 : index
    %c0_3 = arith.constant 0 : index
    %4 = vector.load %arg3[%c0_2, %c0_3] : memref<16x128xf32, #tpu.memory_space<vmem>>, vector<16x128xf32>
    %5 = arith.subf %3, %4 : vector<16x128xf32>
    %6 = arith.mulf %5, %5 : vector<16x128xf32>
    %c0_4 = arith.constant 0 : index
    %c0_5 = arith.constant 0 : index
    %7 = vector.load %arg8[%c0_4, %c0_5] : memref<8x128xf32, #tpu.memory_space<vmem>>, vector<8x128xf32>
    %8 = vector.shape_cast %6 : vector<16x128xf32> to vector<2x8x128xf32>
    %cst = arith.constant dense<0.000000e+00> : vector<8x128xf32>
    %9 = vector.multi_reduction <add>, %8, %cst [0] : vector<2x8x128xf32> to vector<8x128xf32>
    %10 = arith.addf %7, %9 : vector<8x128xf32>
    %c0_6 = arith.constant 0 : index
    %c0_7 = arith.constant 0 : index
    %11 = vector.load %arg8[%c0_6, %c0_7] : memref<8x128xf32, #tpu.memory_space<vmem>>, vector<8x128xf32>
    tpu.vector_store %arg8[%c0_6, %c0_7], %10 {strides = array<i32>} : memref<8x128xf32, #tpu.memory_space<vmem>>, vector<8x128xf32>,
    %c0_i32_8 = arith.constant 0 : i32
    %12 = arith.cmpi eq, %arg1, %c0_i32_8 : i32
    %13 = arith.extui %12 : i1 to i32
    %c0_i32_9 = arith.constant 0 : i32
    %14 = arith.cmpi ne, %13, %c0_i32_9 : i32
    scf.if %14 {
      %c0_14 = arith.constant 0 : index
      %c0_15 = arith.constant 0 : index
      %23 = vector.load %arg8[%c0_14, %c0_15] : memref<8x128xf32, #tpu.memory_space<vmem>>, vector<8x128xf32>
      %24 = vector.shape_cast %23 : vector<8x128xf32> to vector<1x8x128xf32>
      %cst_16 = arith.constant dense<0.000000e+00> : vector<1xf32>
      %25 = vector.multi_reduction <add>, %24, %cst_16 [1, 2] : vector<1x8x128xf32> to vector<1xf32>
      %26 = vector.shape_cast %25 : vector<1xf32> to vector<1x1x1xf32>
      %27 = vector.extract %26[0, 0, 0] : f32 from vector<1x1x1xf32>
      %c0_17 = arith.constant 0 : index
      %c0_18 = arith.constant 0 : index
      %28 = memref.load %arg6[%c0_17, %c0_18] : memref<1x1xf32, #tpu.memory_space<smem>>
      memref.store %27, %arg6[%c0_17, %c0_18] : memref<1x1xf32, #tpu.memory_space<smem>>
    } else {
    }
    %c0_i32_10 = arith.constant 0 : i32
    %15 = arith.cmpi eq, %arg0, %c0_i32_10 : i32
    %16 = arith.andi %12, %15 : i1
    %17 = arith.extui %16 : i1 to i32
    %c0_i32_11 = arith.constant 0 : i32
    %18 = arith.cmpi ne, %17, %c0_i32_11 : i32
    scf.if %18 {
      %c0_14 = arith.constant 0 : index
      %c0_15 = arith.constant 0 : index
      %23 = vector.load %arg5[%c0_14, %c0_15] : memref<4x128xf32, #tpu.memory_space<vmem>>, vector<4x128xf32>
      %c0_16 = arith.constant 0 : index
      %c0_17 = arith.constant 0 : index
      %24 = vector.load %arg4[%c0_16, %c0_17] : memref<4x128xf32, #tpu.memory_space<vmem>>, vector<4x128xf32>
      %25 = arith.subf %23, %24 : vector<4x128xf32>
      %26 = math.absf %25 : vector<4x128xf32>
      %cst_18 = arith.constant 1.000000e+00 : f32
      %27 = vector.broadcast %cst_18 : f32 to vector<4x128xf32>
      %28 = arith.cmpf olt, %26, %27 : vector<4x128xf32>
      %cst_19 = arith.constant 5.000000e-01 : f32
      %29 = vector.broadcast %cst_19 : f32 to vector<4x128xf32>
      %30 = arith.mulf %29, %25 : vector<4x128xf32>
      %31 = arith.mulf %30, %25 : vector<4x128xf32>
      %cst_20 = arith.constant 5.000000e-01 : f32
      %32 = vector.broadcast %cst_20 : f32 to vector<4x128xf32>
      %33 = arith.subf %26, %32 : vector<4x128xf32>
      %34 = arith.select %28, %31, %33 : vector<4x128xi1>, vector<4x128xf32>
      %35 = vector.shape_cast %34 : vector<4x128xf32> to vector<1x4x128xf32>
      %cst_21 = arith.constant dense<0.000000e+00> : vector<1xf32>
      %36 = vector.multi_reduction <add>, %35, %cst_21 [1, 2] : vector<1x4x128xf32> to vector<1xf32>
      %37 = vector.shape_cast %36 : vector<1xf32> to vector<1x1x1xf32>
      %38 = vector.extract %37[0, 0, 0] : f32 from vector<1x1x1xf32>
      %c0_22 = arith.constant 0 : index
      %c0_23 = arith.constant 0 : index
      %39 = memref.load %arg7[%c0_22, %c0_23] : memref<1x1xf32, #tpu.memory_space<smem>>
      memref.store %38, %arg7[%c0_22, %c0_23] : memref<1x1xf32, #tpu.memory_space<smem>>
    } else {
    }
    %c0_i32_12 = arith.constant 0 : i32
    %19 = arith.cmpi ne, %arg0, %c0_i32_12 : i32
    %20 = arith.andi %12, %19 : i1
    %21 = arith.extui %20 : i1 to i32
    %c0_i32_13 = arith.constant 0 : i32
    %22 = arith.cmpi ne, %21, %c0_i32_13 : i32
    scf.if %22 {
      %cst_14 = arith.constant 0.000000e+00 : f32
      %c0_15 = arith.constant 0 : index
      %c0_16 = arith.constant 0 : index
      %23 = memref.load %arg7[%c0_15, %c0_16] : memref<1x1xf32, #tpu.memory_space<smem>>
      memref.store %cst_14, %arg7[%c0_15, %c0_16] : memref<1x1xf32, #tpu.memory_space<smem>>
    } else {
    }
    return
  }
  func.func @transform_0(%arg0: i32, %arg1: i32) -> (i32, i32) {
    %c1_i32 = arith.constant 1 : i32
    %0 = arith.muli %arg0, %c1_i32 : i32
    %1 = arith.addi %0, %arg1 : i32
    %c0_i32 = arith.constant 0 : i32
    %2 = arith.minsi %1, %c0_i32 : i32
    %c0_i32_0 = arith.constant 0 : i32
    %c0_i32_1 = arith.constant 0 : i32
    return %2, %c0_i32_0 : i32, i32
  }
  func.func @transform_1(%arg0: i32, %arg1: i32) -> (i32, i32) {
    %c1_i32 = arith.constant 1 : i32
    %0 = arith.muli %arg0, %c1_i32 : i32
    %1 = arith.addi %0, %arg1 : i32
    %c0_i32 = arith.constant 0 : i32
    %2 = arith.minsi %1, %c0_i32 : i32
    %c0_i32_0 = arith.constant 0 : i32
    %c0_i32_1 = arith.constant 0 : i32
    return %2, %c0_i32_0 : i32, i32
  }
  func.func @transform_2(%arg0: i32, %arg1: i32) -> (i32, i32) {
    %c0_i32 = arith.constant 0 : i32
    %c0_i32_0 = arith.constant 0 : i32
    %c0_i32_1 = arith.constant 0 : i32
    return %c0_i32, %c0_i32_0 : i32, i32
  }
  func.func @transform_3(%arg0: i32, %arg1: i32) -> (i32, i32) {
    %c0_i32 = arith.constant 0 : i32
    %c0_i32_0 = arith.constant 0 : i32
    %c0_i32_1 = arith.constant 0 : i32
    return %c0_i32, %c0_i32_0 : i32, i32
  }
  func.func @transform_4(%arg0: i32, %arg1: i32) -> (i32, i32) {
    %c0_i32 = arith.constant 0 : i32
    %c0_i32_0 = arith.constant 0 : i32
    return %arg0, %c0_i32 : i32, i32
  }
  func.func @transform_5(%arg0: i32, %arg1: i32) -> (i32, i32) {
    %c0_i32 = arith.constant 0 : i32
    %c0_i32_0 = arith.constant 0 : i32
    return %arg0, %c0_i32 : i32, i32
  }
}

</mosaic_0001>

<llo_original>
// kernel: segmentation_loss.1
$region0: #{segmentation_loss.1}
  #allocation0 [shape = 'u32[]', space=smem, size = 0x4, offset = 0x4, fixed_abs, tag = 'smem constant byte address 0x4 - core index']
  #allocation1 [shape = 'u32[72,128]{1,0:T(1,128)}', space=vmem, size = 0x9000, scoped, tag = 'internal scratch']
  #allocation2 [shape = 'f32[8,128]{1,0:T(8,128)}', space=vmem, size = 0x1000, scoped, tag = 'scratch operand']
  %s0 = inlined_call_operand.vmem [shape: f32[16,128], index: 0, kind: input, shape index: {}]
  %s1 = inlined_call_operand.vmem [shape: f32[16,128], index: 1, kind: input, shape index: {}]
  %s2 = inlined_call_operand.vmem [shape: f32[4,128], index: 2, kind: input, shape index: {}]
  %s3 = inlined_call_operand.vmem [shape: f32[4,128], index: 3, kind: input, shape index: {}]
  %s4 = inlined_call_operand.hbm [shape: f32[1,1], index: 4, kind: output, shape index: {0}]
  %s5 = inlined_call_operand.hbm [shape: f32[1,1], index: 5, kind: output, shape index: {1}]
  %6 = xla_tuple %s4, %s5
  %s7 = sld [smem:[#allocation0]]
  $region50: #{segmentation_loss.1} parent=0
    _
  %s9 = ssub.s32 1, %s7
  %s10 = scalar_select 0, %s9, %s7
  $region1: #{segmentation_loss.1} parent=0
    #allocation3 [shape = 'u8[512]{0}', space=smem, size = 0x200, scoped, tag = 'output window, operand 0, single buffered']
    #allocation4 [shape = 's32[1]{0}', space=sflag, size = 0x4, scoped, tag = 'scoped memory for segmentation_loss.1']
    #allocation5 [shape = 'u8[512]{0}', space=smem, size = 0x200, scoped, tag = 'output window, operand 1, single buffered']
    #allocation6 [shape = 's32[1]{0}', space=sflag, size = 0x4, scoped, tag = 'scoped memory for segmentation_loss.1']
    %11 = vsyncpa [#allocation4], 0
    %12 = vsyncpa [#allocation6], 0
    // Predicated region
    $region2: #{segmentation_loss.1} parent=1 // pred_check
      _
    $region3: #{segmentation_loss.1} parent=1 // pred_check_branch
      %14 = sbr.rel (0) target = $region5
    $region4: #{segmentation_loss.1} parent=1 // pred_region
      %s15 = sadd.s32 0, 0
      %p16 = scmp.lt.s32.totalorder %s15, 0
      %s17 = scalar_select %p16, %s15, 0
      %s18 = smul.u32 2, %s17
      %p19 = scmp.lt.s32.totalorder %s18, 1
      %s20 = scalar_select %p19, %s18, 1
      %s21 = smul.addr %s20, 8
      %s22 = scalar_lea.vmem %s0, %s21
      %s23 = sadd.s32 0, 0
      %p24 = scmp.lt.s32.totalorder %s23, 0
      %s25 = scalar_select %p24, %s23, 0
      %s26 = smul.u32 2, %s25
    $region5: #{segmentation_loss.1} parent=1 // pred_fallthru
      _
    // Predicated region
    $region6: #{segmentation_loss.1} parent=1 // pred_check
      _
    $region7: #{segmentation_loss.1} parent=1 // pred_check_branch
      %28 = sbr.rel (0) target = $region9
    $region8: #{segmentation_loss.1} parent=1 // pred_region
      %s29 = sadd.s32 0, 0
      %p30 = scmp.lt.s32.totalorder %s29, 0
      %s31 = scalar_select %p30, %s29, 0
      %s32 = smul.u32 2, %s31
      %p33 = scmp.lt.s32.totalorder %s32, 1
      %s34 = scalar_select %p33, %s32, 1
      %s35 = smul.addr %s34, 8
      %s36 = scalar_lea.vmem %s1, %s35
      %s37 = sadd.s32 0, 0
      %p38 = scmp.lt.s32.totalorder %s37, 0
      %s39 = scalar_select %p38, %s37, 0
      %s40 = smul.u32 2, %s39
    $region9: #{segmentation_loss.1} parent=1 // pred_fallthru
      _
    // Predicated region
    $region10: #{segmentation_loss.1} parent=1 // pred_check
      _
    $region11: #{segmentation_loss.1} parent=1 // pred_check_branch
      %42 = sbr.rel (0) target = $region13
    $region12: #{segmentation_loss.1} parent=1 // pred_region
      _
    $region13: #{segmentation_loss.1} parent=1 // pred_fallthru
      _
    // Predicated region
    $region14: #{segmentation_loss.1} parent=1 // pred_check
      _
    $region15: #{segmentation_loss.1} parent=1 // pred_check_branch
      %44 = sbr.rel (0) target = $region17
    $region16: #{segmentation_loss.1} parent=1 // pred_region
      _
    $region17: #{segmentation_loss.1} parent=1 // pred_fallthru
      _
    %s45 = sadd.s32 0, 0
    %p46 = scmp.lt.s32.totalorder %s45, 0
    %s47 = scalar_select %p46, %s45, 0
    %s48 = smul.u32 2, %s47
    %p49 = scmp.lt.s32.totalorder %s48, 1
    %s50 = scalar_select %p49, %s48, 1
    %s51 = smul.addr %s50, 8
    %s52 = scalar_lea.vmem %s0, %s51
    %s53 = sadd.s32 0, 0
    %p54 = scmp.lt.s32.totalorder %s53, 0
    %s55 = scalar_select %p54, %s53, 0
    %s56 = smul.u32 2, %s55
    %p57 = scmp.lt.s32.totalorder %s56, 1
    %s58 = scalar_select %p57, %s56, 1
    %s59 = smul.addr %s58, 8
    %s60 = scalar_lea.vmem %s1, %s59
    %s61 = sadd.s32 0, 0
    %p62 = scmp.lt.s32.totalorder %s61, 0
    %s63 = scalar_select %p62, %s61, 0
    %s64 = smul.u32 2, %s63
    %p65 = scmp.lt.s32.totalorder %s64, 1
    %s66 = scalar_select %p65, %s64, 1
    %s67 = smul.addr %s66, 8
    %s68 = scalar_lea.vmem %s0, %s67
    %s69 = sadd.s32 0, 0
    %p70 = scmp.lt.s32.totalorder %s69, 0
    %s71 = scalar_select %p70, %s69, 0
    %s72 = smul.u32 2, %s71
    %s73 = sadd.s32 0, 0
    %p74 = scmp.lt.s32.totalorder %s73, 0
    %s75 = scalar_select %p74, %s73, 0
    %s76 = smul.u32 2, %s75
    %p77 = scmp.lt.s32.totalorder %s76, 1
    %s78 = scalar_select %p77, %s76, 1
    %s79 = smul.addr %s78, 8
    %s80 = scalar_lea.vmem %s1, %s79
    %s81 = sadd.s32 0, 0
    %p82 = scmp.lt.s32.totalorder %s81, 0
    %s83 = scalar_select %p82, %s81, 0
    %s84 = smul.u32 2, %s83
    %p85 = scmp.eq.s32.totalorder 0, 0
    // Predicated region
    $region18: #{segmentation_loss.1} parent=1 // pred_check
      %p86 = pneg %p85
    $region19: #{segmentation_loss.1} parent=1 // pred_check_branch
      %88 = sbr.rel (%p86) target = $region21
    $region20: #{segmentation_loss.1} parent=1 // pred_region
      %89 = vst [vmem:[#allocation2] sm:$0xff] 0.0
    $region21: #{segmentation_loss.1} parent=1 // pred_fallthru
      _
    %v90 = vld [vmem:[%s68] sm:$0xff]
    %v91 = vld [vmem:[%s68 + $0x8] sm:$0xff]
    %v92 = vld [vmem:[%s80] sm:$0xff]
    %v93 = vld [vmem:[%s80 + $0x8] sm:$0xff]
    %v94 = vsub.f32 %v90, %v92
    %v95 = vsub.f32 %v91, %v93
    %v96 = vmul.f32 %v94, %v94
    %v97 = vmul.f32 %v95, %v95
    %v98 = vld [vmem:[#allocation2] sm:$0xff]
    %v99 = vadd.f32 %v96, %v97
    %v100 = vadd.f32 %v98, %v99
    %101 = vst [vmem:[#allocation2] sm:$0xff] %v100
    // Predicated region
    $region22: #{segmentation_loss.1} parent=1 // pred_check
      %p102 = pneg %p85
    $region23: #{segmentation_loss.1} parent=1 // pred_check_branch
      %104 = sbr.rel (%p102) target = $region25
    $region24: #{segmentation_loss.1} parent=1 // pred_region
      %v105 = vld [vmem:[#allocation2] sm:$0xff]
      %106 = vadd.xlane.f32.xlu0 %v105
      %v107 = vpop.xlane.xlu0 %106
      %v108 = vrot.slane %v107, 4
      %v109 = vadd.f32 %v107, %v108
      %v110 = vrot.slane %v109, 2
      %v111 = vadd.f32 %v109, %v110
      %v112 = vrot.slane %v111, 1
      %v113 = vadd.f32 %v111, %v112
      %s114 = vtos %v113
      %s115 = scalar_lea.smem [#allocation3], 0
      %116 = sst [smem:[%s115]] %s114
    $region25: #{segmentation_loss.1} parent=1 // pred_fallthru
      _
    %p117 = scmp.eq.s32.totalorder 0, 0
    %p118 = pnand %p85, %p117
    %p119 = pneg %p118
    // Predicated region
    $region26: #{segmentation_loss.1} parent=1 // pred_check
      _
    $region27: #{segmentation_loss.1} parent=1 // pred_check_branch
      %121 = sbr.rel (%p118) target = $region29
    $region28: #{segmentation_loss.1} parent=1 // pred_region
      %v122 = vld [vmem:[%s3] sm:$0xf]
      %v123 = vld [vmem:[%s2] sm:$0xf]
      %v124 = vsub.f32 %v122, %v123
      %v125 = vand.u32 2147483647, %v124
      %vm126 = vcmp.lt.f32.partialorder %v125, 1.0
      %v127 = vmul.f32 %v124, 0.5
      %v128 = vmul.f32 %v127, %v124
      %v129 = vsub.f32 %v125, 0.5
      %v130 = vsel %vm126, %v128, %v129
      %vm131 = vcmask 1043456
      %v132 = vsel %vm131, %v130, 0.0
      %133 = vadd.xlane.f32.xlu0 %v132
      %v134 = vpop.xlane.xlu0 %133
      %v135 = vrot.slane %v134, 4
      %v136 = vadd.f32 %v134, %v135
      %v137 = vrot.slane %v136, 2
      %v138 = vadd.f32 %v136, %v137
      %v139 = vrot.slane %v138, 1
      %v140 = vadd.f32 %v138, %v139
      %s141 = vtos %v140
      %s142 = scalar_lea.smem [#allocation5], 0
      %143 = sst [smem:[%s142]] %s141
    $region29: #{segmentation_loss.1} parent=1 // pred_fallthru
      _
    %p144 = scmp.ne.s32.totalorder 0, 0
    %p145 = pnand %p85, %p144
    %p146 = pneg %p145
    // Predicated region
    $region30: #{segmentation_loss.1} parent=1 // pred_check
      _
    $region31: #{segmentation_loss.1} parent=1 // pred_check_branch
      %148 = sbr.rel (%p145) target = $region33
    $region32: #{segmentation_loss.1} parent=1 // pred_region
      %s149 = scalar_lea.smem [#allocation5], 0
      %150 = sst [smem:[%s149]] 0.0
    $region33: #{segmentation_loss.1} parent=1 // pred_fallthru
      _
    // Predicated region
    $region34: #{segmentation_loss.1} parent=1 // pred_check
      _
    $region35: #{segmentation_loss.1} parent=1 // pred_check_branch
      %152 = sbr.rel (0) target = $region37
    $region36: #{segmentation_loss.1} parent=1 // pred_region
      %154 = vsyncadd [#allocation4], 0
      %s156 = sshll.u32 %s4, 4
      %s157 = int_to_ptr.hbm [resolvable:$true] %s156
      %159 = dma.smem_to_hbm [#allocation3], 16, %s157, [#allocation4]
    $region37: #{segmentation_loss.1} parent=1 // pred_fallthru
      _
    // Predicated region
    $region38: #{segmentation_loss.1} parent=1 // pred_check
      _
    $region39: #{segmentation_loss.1} parent=1 // pred_check_branch
      %161 = sbr.rel (0) target = $region41
    $region40: #{segmentation_loss.1} parent=1 // pred_region
      %163 = vsyncadd [#allocation6], 0
      %s165 = sshll.u32 %s5, 4
      %s166 = int_to_ptr.hbm [resolvable:$true] %s165
      %168 = dma.smem_to_hbm [#allocation5], 16, %s166, [#allocation6]
    $region41: #{segmentation_loss.1} parent=1 // pred_fallthru
      _
    // Predicated region
    $region42: #{segmentation_loss.1} parent=1 // pred_check
      _
    $region43: #{segmentation_loss.1} parent=1 // pred_check_branch
      %170 = sbr.rel (0) target = $region45
    $region44: #{segmentation_loss.1} parent=1 // pred_region
      %172 = dma.done [#allocation4], 16
    $region45: #{segmentation_loss.1} parent=1 // pred_fallthru
      _
    // Predicated region
    $region46: #{segmentation_loss.1} parent=1 // pred_check
      _
    $region47: #{segmentation_loss.1} parent=1 // pred_check_branch
      %174 = sbr.rel (0) target = $region49
    $region48: #{segmentation_loss.1} parent=1 // pred_region
      %176 = dma.done [#allocation6], 16
    $region49: #{segmentation_loss.1} parent=1 // pred_fallthru
      _
    %177 = sfence
    %178 = vsyncpa [#allocation4], 1
    %179 = vsyncpa [#allocation6], 1

</llo_original>
